<compile_context>
chip_gen: v5e
topology: v5e:2x2
jax: 0.10.0
libtpu: 0.0.40
codegen_flags: <defaults>
</compile_context>

<pallas_src>
import jax
import jax.numpy as jnp
from jax.experimental import pallas as pl
from jax.experimental.pallas import tpu as pltpu


def _round_up(x: int, m: int) -> int:
    return ((x + m - 1) // m) * m


def _vmem_budget_bytes() -> int:
    """~85% of physical per-core VMEM; conservative 64 MiB fallback."""
    try:
        cap = int(pltpu.get_tpu_info().vmem_capacity_bytes)
    except Exception:
        cap = 64 * 1024 * 1024
    return int(0.85 * cap)


def _pick_h_tile(H_p: int, target: int) -> int:
    """128-aligned divisor of H_p, preferring 256 alignment (2x256^2 MXUs)."""
    target = min(_round_up(max(target, 128), 128), H_p)
    if H_p % 256 == 0 and target >= 256:
        ht = (target // 256) * 256
        while H_p % ht != 0:
            ht -= 256
        return ht
    ht = target
    while H_p % ht != 0:
        ht -= 128
    return ht


# ----------------------------- kernels ---------------------------------------


def _mlp_kernel_resident(x_ref, w1_ref, b1_ref, w2_ref, b2_ref, o_ref):
    """Grid = (batch_tiles,).  Whole W1/W2 resident in VMEM (loaded once)."""
    h = jnp.dot(x_ref[...], w1_ref[...], preferred_element_type=jnp.float32)
    h = jnp.maximum(h + b1_ref[...], 0.0)
    out = jnp.dot(h.astype(w2_ref.dtype), w2_ref[...],
                  preferred_element_type=jnp.float32)
    o_ref[...] = (out + b2_ref[...]).astype(o_ref.dtype)


def _mlp_kernel_stream_f32out(x_ref, w1_ref, b1_ref, w2_ref, b2_ref, o_ref):
    """Grid = (batch_tiles, hidden_chunks).  f32 output accumulates in o_ref."""
    k = pl.program_id(1)

    @pl.when(k == 0)
    def _init():
        o_ref[...] = jnp.zeros_like(o_ref)

    h = jnp.dot(x_ref[...], w1_ref[...], preferred_element_type=jnp.float32)
    h = jnp.maximum(h + b1_ref[...], 0.0)
    o_ref[...] += jnp.dot(h.astype(w2_ref.dtype), w2_ref[...],
                          preferred_element_type=jnp.float32)

    @pl.when(k == pl.num_programs(1) - 1)
    def _finalize():
        o_ref[...] += b2_ref[...]


def _mlp_kernel_stream_acc(x_ref, w1_ref, b1_ref, w2_ref, b2_ref, o_ref, acc_ref):
    """Streaming variant for non-f32 outputs: f32 scratch accumulator."""
    k = pl.program_id(1)

    @pl.when(k == 0)
    def _init():
        acc_ref[...] = jnp.zeros_like(acc_ref)

    h = jnp.dot(x_ref[...], w1_ref[...], preferred_element_type=jnp.float32)
    h = jnp.maximum(h + b1_ref[...], 0.0)
    acc_ref[...] += jnp.dot(h.astype(w2_ref.dtype), w2_ref[...],
                            preferred_element_type=jnp.float32)

    @pl.when(k == pl.num_programs(1) - 1)
    def _finalize():
        o_ref[...] = (acc_ref[...] + b2_ref[...]).astype(o_ref.dtype)


# --------------------------- host-side wrapper --------------------------------


def prepare_mlp_params(w1, b1, w2, b2, *, compute_dtype=jnp.bfloat16):
    """Pad feature dims to 128 and cast weights ONCE (reused across calls).

    w1: (D_in, H) pre-transposed, b1: (H,), w2: (H, D_out), b2: (D_out,).
    """
    D_in, H = w1.shape
    H2, D_out = w2.shape
    assert H2 == H and b1.shape == (H,) and b2.shape == (D_out,)
    compute_dtype = jnp.dtype(compute_dtype)
    f32 = jnp.float32
    D_in_p, H_p, D_out_p = (_round_up(d, 128) for d in (D_in, H, D_out))

    w1p = jnp.zeros((D_in_p, H_p), compute_dtype).at[:D_in, :H].set(
        w1.astype(compute_dtype))
    w2p = jnp.zeros((H_p, D_out_p), compute_dtype).at[:H, :D_out].set(
        w2.astype(compute_dtype))
    b1p = jnp.zeros((1, H_p), f32).at[0, :H].set(b1.astype(f32))
    b2p = jnp.zeros((1, D_out_p), f32).at[0, :D_out].set(b2.astype(f32))
    return dict(w1p=w1p, b1p=b1p, w2p=w2p, b2p=b2p,
                dims=(D_in, H, D_out), compute_dtype=compute_dtype)


def mlp_forward(x, params, *, batch_tile=None, h_tile=512, out_dtype=None,
                force_stream=False, weight_buffers=2, vmem_limit_bytes=None):
    """x: (B, D_in); params from prepare_mlp_params.  Returns (B, D_out)."""
    assert x.ndim == 2
    B, D_in = x.shape
    D_in_ck, H, D_out = params["dims"]
    assert D_in == D_in_ck
    w1p, b1p, w2p, b2p = params["w1p"], params["b1p"], params["w2p"], params["b2p"]
    compute_dtype = jnp.dtype(params["compute_dtype"])
    cbytes = compute_dtype.itemsize
    D_in_p, H_p = w1p.shape
    D_out_p = w2p.shape[1]

    if out_dtype is None:
        out_dtype = x.dtype
    out_dtype = jnp.dtype(out_dtype)
    ob = out_dtype.itemsize

    user_vlim = vmem_limit_bytes
    budget = int(user_vlim) if user_vlim is not None else _vmem_budget_bytes()

    sub = 16 if cbytes < 4 else 8          # sublane alignment for batch tiles
    B_sub = _round_up(B, sub)

    weight_bytes = (w1p.size + w2p.size) * cbytes + (b1p.size + b2p.size) * 4
    resident = (not force_stream) and (weight_bytes <= budget // 3)

    bt = ht = None
    use_acc = False

    if resident:
        bt = 256 if batch_tile is None else batch_tile
        bt = max(sub, min(_round_up(bt, sub), B_sub))

        def need_res(bt_):
            return (2 * (bt_ * D_in_p * cbytes + bt_ * D_out_p * ob)
                    + 2 * weight_bytes
                    + bt_ * H_p * (4 + cbytes))        # fc1 h (f32) + cast copy

        while need_res(bt) > budget and bt > sub:
            bt = max(sub, _round_up(bt // 2, sub))
        if need_res(bt) > budget:
            resident = False                            # fall back to streaming
        else:
            need = need_res(bt)

    if not resident:
        # Streamed weights: raise bt toward the roofline knee (v7x ~310 flop/B,
        # v6e ~650 flop/B); smaller VMEM => assume v7x-class chip.
        bt_target = batch_tile if batch_tile is not None else \
            (512 if budget < 80 * 1024 * 1024 else 768)
        bt = max(sub, min(_round_up(bt_target, sub), B_sub))
        ht = _pick_h_tile(H_p, h_tile)
        use_acc = out_dtype != jnp.float32

        def need_str(bt_, ht_):
            per = (bt_ * D_in_p * cbytes + D_in_p * ht_ * cbytes
                   + ht_ * D_out_p * cbytes + ht_ * 4 + D_out_p * 4
                   + bt_ * D_out_p * ob)
            n = 2 * per
            n += max(0, weight_buffers - 2) * (D_in_p * ht_ + ht_ * D_out_p) * cbytes
            n += bt_ * ht_ * (4 + cbytes)              # fc1 h (f32) + cast copy
            if use_acc:
                n += bt_ * D_out_p * 4
            return n

        while need_str(bt, ht) > budget:
            if ht > 128:
                new_ht = _pick_h_tile(H_p, ht // 2)
                if new_ht < ht:
                    ht = new_ht
                    continue
            if bt > sub:
                bt = max(sub, _round_up(bt // 2, sub))
                continue
            break
        need = need_str(bt, ht)

    # v7x megacore: prefer >=2 batch tiles so the "parallel" axis shards across
    # both TensorCores (only when the batch is large enough to matter).
    if B_sub >= 512 and B_sub // bt < 2:
        bt = max(sub, _round_up((B_sub + 1) // 2, sub))

    B_p = _round_up(B, bt)
    n_bt = B_p // bt

    # Per-call padding/cast of the activations only (weights prepared once).
    xp = jnp.zeros((B_p, D_in_p), compute_dtype).at[:B, :D_in].set(
        x.astype(compute_dtype))

    w_stream_factor = 1 if resident else n_bt
    cost = pl.CostEstimate(
        flops=2 * B_p * (D_in_p * H_p + H_p * D_out_p),
        transcendentals=0,
        bytes_accessed=(xp.size * cbytes
                        + w_stream_factor * weight_bytes
                        + B_p * D_out_p * ob),
    )

    if user_vlim is not None:
        vlim = int(user_vlim)
    else:
        vlim = int(min(budget, max(int(1.2 * need), 32 * 1024 * 1024)))

    if resident:
        out_p = pl.pallas_call(
            _mlp_kernel_resident,
            out_shape=jax.ShapeDtypeStruct((B_p, D_out_p), out_dtype),
            grid_spec=pltpu.PrefetchScalarGridSpec(
                num_scalar_prefetch=0,
                grid=(n_bt,),
                in_specs=[
                    pl.BlockSpec((bt, D_in_p), lambda i: (i, 0)),       # x tile
                    pl.BlockSpec((D_in_p, H_p), lambda i: (0, 0)),      # W1 (resident)
                    pl.BlockSpec((1, H_p), lambda i: (0, 0)),           # b1
                    pl.BlockSpec((H_p, D_out_p), lambda i: (0, 0)),     # W2 (resident)
                    pl.BlockSpec((1, D_out_p), lambda i: (0, 0)),       # b2
                ],
                out_specs=pl.BlockSpec((bt, D_out_p), lambda i: (i, 0)),
            ),
            compiler_params=pltpu.CompilerParams(
                dimension_semantics=("parallel",),
                vmem_limit_bytes=vlim),
            cost_estimate=cost,
        )(xp, w1p, b1p, w2p, b2p)
    else:
        # Optional deeper pipelining of streamed weight slices (v5e: Buffered(3)).
        w_kw = {} if weight_buffers <= 2 else dict(pipeline_mode=pl.Buffered(weight_buffers))
        w1_spec = pl.BlockSpec((D_in_p, ht), lambda i, k: (0, k), **w_kw)
        w2_spec = pl.BlockSpec((ht, D_out_p), lambda i, k: (k, 0), **w_kw)
        kernel = _mlp_kernel_stream_acc if use_acc else _mlp_kernel_stream_f32out
        scratch = [pltpu.VMEM((bt, D_out_p), jnp.float32)] if use_acc else []
        out_p = pl.pallas_call(
            kernel,
            out_shape=jax.ShapeDtypeStruct((B_p, D_out_p), out_dtype),
            grid_spec=pltpu.PrefetchScalarGridSpec(
                num_scalar_prefetch=0,
                grid=(n_bt, H_p // ht),
                in_specs=[
                    pl.BlockSpec((bt, D_in_p), lambda i, k: (i, 0)),    # x tile
                    w1_spec,                                            # W1 slice
                    pl.BlockSpec((1, ht), lambda i, k: (0, k)),         # b1 slice
                    w2_spec,                                            # W2 slice
                    pl.BlockSpec((1, D_out_p), lambda i, k: (0, 0)),    # b2
                ],
                out_specs=pl.BlockSpec((bt, D_out_p), lambda i, k: (i, 0)),
                scratch_shapes=scratch,
            ),
            compiler_params=pltpu.CompilerParams(
                dimension_semantics=("parallel", "arbitrary"),
                vmem_limit_bytes=vlim),
            cost_estimate=cost,
        )(xp, w1p, b1p, w2p, b2p)

    return out_p[:B, :D_out]


def init_linear_params(key, in_features, out_features, dtype=jnp.float32):
    """nn.Linear default init: U(-1/sqrt(in), 1/sqrt(in)); weight pre-transposed."""
    k_w, k_b = jax.random.split(key)
    bound = 1.0 / (in_features ** 0.5)
    w = jax.random.uniform(k_w, (in_features, out_features), dtype,
                           minval=-bound, maxval=bound)
    b = jax.random.uniform(k_b, (out_features,), dtype,
                           minval=-bound, maxval=bound)
    return w, b


if __name__ == "__main__":
    key = jax.random.PRNGKey(0)
    k_x, k_fc1, k_fc2, k_x2, k_fc3, k_fc4 = jax.random.split(key, 6)
    f32 = jnp.float32

    # --- case 1: tiny f32 MLP, weight-resident single-pass path --------------
    B, D_in, H, D_out = 8, 16, 32, 10
    x = jax.random.normal(k_x, (B, D_in), f32)
    w1, b1 = init_linear_params(k_fc1, D_in, H)
    w2, b2 = init_linear_params(k_fc2, H, D_out)
    params_f32 = prepare_mlp_params(w1, b1, w2, b2, compute_dtype=jnp.float32)

    out = jax.block_until_ready(mlp_forward(x, params_f32))
    ref = jnp.maximum(x @ w1 + b1, 0.0) @ w2 + b2
    assert out.shape == (B, D_out)
    assert jnp.allclose(out, ref, atol=1e-5, rtol=1e-5), "f32 resident mismatch"

    # --- case 2: ragged batch, bf16 compute (default), forced streaming, f32 out
    B2, D_in2, H2, D_out2 = 40, 48, 200, 10
    x2 = jax.random.normal(k_x2, (B2, D_in2), f32)
    w1b, b1b = init_linear_params(k_fc3, D_in2, H2)
    w2b, b2b = init_linear_params(k_fc4, H2, D_out2)
    params_bf16 = prepare_mlp_params(w1b, b1b, w2b, b2b)   # bf16 default

    out2 = jax.block_until_ready(
        mlp_forward(x2, params_bf16, batch_tile=16, h_tile=128, force_stream=True))

    xb = x2.astype(jnp.bfloat16).astype(f32)
    w1f = w1b.astype(jnp.bfloat16).astype(f32)
    w2f = w2b.astype(jnp.bfloat16).astype(f32)
    hb = jnp.maximum(xb @ w1f + b1b, 0.0).astype(jnp.bfloat16).astype(f32)
    ref2 = hb @ w2f + b2b
    assert out2.shape == (B2, D_out2)
    assert jnp.allclose(out2, ref2, atol=2e-2, rtol=2e-2), "bf16 streaming mismatch"

    # --- case 3: streaming with non-f32 output (exercises scratch accumulator)
    out3 = jax.block_until_ready(
        mlp_forward(x2, params_bf16, batch_tile=16, h_tile=128,
                    force_stream=True, out_dtype=jnp.bfloat16))
    assert out3.dtype == jnp.bfloat16
    assert jnp.allclose(out3.astype(f32), ref2, atol=6e-2, rtol=6e-2), \
        "bf16-out streaming mismatch"

    # --- case 4: bf16 weight-resident path (default tiles) -------------------
    out4 = jax.block_until_ready(mlp_forward(x2, params_bf16))
    assert jnp.allclose(out4, ref2, atol=2e-2, rtol=2e-2), "bf16 resident mismatch"

    print("KERNEL_OK")
</pallas_src>

<mosaic_0001>
module attributes {stable_mosaic.version = 11 : i64} {
  func.func @_mlp_kernel_resident(%arg0: i32, %arg1: memref<8x128xf32, #tpu.memory_space<vmem>>, %arg2: memref<128x128xf32, #tpu.memory_space<vmem>>, %arg3: memref<1x128xf32, #tpu.memory_space<vmem>>, %arg4: memref<128x128xf32, #tpu.memory_space<vmem>>, %arg5: memref<1x128xf32, #tpu.memory_space<vmem>>, %arg6: memref<8x128xf32, #tpu.memory_space<vmem>>) attributes {dimension_semantics = [#tpu.dimension_semantics<parallel>], iteration_bounds = array<i64: 1>, scalar_prefetch = 0 : i64, scratch_operands = 0 : i64, tpu.core_type = #tpu.core_type<tc>, window_params = [{transform_indices = @transform_0, window_bounds = array<i64: 8, 128>}, {pipeline_mode = #tpu.pipeline_mode<synchronous>, transform_indices = @transform_1, window_bounds = array<i64: 128, 128>}, {pipeline_mode = #tpu.pipeline_mode<synchronous>, transform_indices = @transform_2, window_bounds = array<i64: 1, 128>}, {pipeline_mode = #tpu.pipeline_mode<synchronous>, transform_indices = @transform_3, window_bounds = array<i64: 128, 128>}, {pipeline_mode = #tpu.pipeline_mode<synchronous>, transform_indices = @transform_4, window_bounds = array<i64: 1, 128>}, {transform_indices = @transform_5, window_bounds = array<i64: 8, 128>}]} {
    %c0 = arith.constant 0 : index
    %c0_0 = arith.constant 0 : index
    %0 = vector.load %arg1[%c0, %c0_0] : memref<8x128xf32, #tpu.memory_space<vmem>>, vector<8x128xf32>
    %c0_1 = arith.constant 0 : index
    %c0_2 = arith.constant 0 : index
    %1 = vector.load %arg2[%c0_1, %c0_2] : memref<128x128xf32, #tpu.memory_space<vmem>>, vector<128x128xf32>
    %cst = arith.constant dense<0.000000e+00> : vector<8x128xf32>
    %2 = tpu.matmul %0, %1, %cst {dimension_numbers = #tpu.dot_dimension_numbers<[1], [0], [0], [1], [0, 0, 1, 1], [], []>} : vector<8x128xf32>, vector<128x128xf32>, vector<8x128xf32> -> vector<8x128xf32>
    %c0_3 = arith.constant 0 : index
    %c0_4 = arith.constant 0 : index
    %3 = vector.load %arg3[%c0_3, %c0_4] : memref<1x128xf32, #tpu.memory_space<vmem>>, vector<1x128xf32>
    %4 = vector.broadcast %3 : vector<1x128xf32> to vector<8x128xf32>
    %5 = arith.addf %2, %4 : vector<8x128xf32>
    %cst_5 = arith.constant 0.000000e+00 : f32
    %6 = vector.broadcast %cst_5 : f32 to vector<8x128xf32>
    %7 = arith.maximumf %5, %6 : vector<8x128xf32>
    %c0_6 = arith.constant 0 : index
    %c0_7 = arith.constant 0 : index
    %8 = vector.load %arg4[%c0_6, %c0_7] : memref<128x128xf32, #tpu.memory_space<vmem>>, vector<128x128xf32>
    %cst_8 = arith.constant dense<0.000000e+00> : vector<8x128xf32>
    %9 = tpu.matmul %7, %8, %cst_8 {dimension_numbers = #tpu.dot_dimension_numbers<[1], [0], [0], [1], [0, 0, 1, 1], [], []>} : vector<8x128xf32>, vector<128x128xf32>, vector<8x128xf32> -> vector<8x128xf32>
    %c0_9 = arith.constant 0 : index
    %c0_10 = arith.constant 0 : index
    %10 = vector.load %arg5[%c0_9, %c0_10] : memref<1x128xf32, #tpu.memory_space<vmem>>, vector<1x128xf32>
    %11 = vector.broadcast %10 : vector<1x128xf32> to vector<8x128xf32>
    %12 = arith.addf %9, %11 : vector<8x128xf32>
    %c0_11 = arith.constant 0 : index
    %c0_12 = arith.constant 0 : index
    %13 = vector.load %arg6[%c0_11, %c0_12] : memref<8x128xf32, #tpu.memory_space<vmem>>, vector<8x128xf32>
    tpu.vector_store %arg6[%c0_11, %c0_12], %12 {strides = array<i32>} : memref<8x128xf32, #tpu.memory_space<vmem>>, vector<8x128xf32>,
    return
  }
  func.func @transform_0(%arg0: i32) -> (i32, i32) {
    %c0_i32 = arith.constant 0 : i32
    %c0_i32_0 = arith.constant 0 : i32
    return %arg0, %c0_i32 : i32, i32
  }
  func.func @transform_1(%arg0: i32) -> (i32, i32) {
    %c0_i32 = arith.constant 0 : i32
    %c0_i32_0 = arith.constant 0 : i32
    %c0_i32_1 = arith.constant 0 : i32
    return %c0_i32, %c0_i32_0 : i32, i32
  }
  func.func @transform_2(%arg0: i32) -> (i32, i32) {
    %c0_i32 = arith.constant 0 : i32
    %c0_i32_0 = arith.constant 0 : i32
    %c0_i32_1 = arith.constant 0 : i32
    return %c0_i32, %c0_i32_0 : i32, i32
  }
  func.func @transform_3(%arg0: i32) -> (i32, i32) {
    %c0_i32 = arith.constant 0 : i32
    %c0_i32_0 = arith.constant 0 : i32
    %c0_i32_1 = arith.constant 0 : i32
    return %c0_i32, %c0_i32_0 : i32, i32
  }
  func.func @transform_4(%arg0: i32) -> (i32, i32) {
    %c0_i32 = arith.constant 0 : i32
    %c0_i32_0 = arith.constant 0 : i32
    %c0_i32_1 = arith.constant 0 : i32
    return %c0_i32, %c0_i32_0 : i32, i32
  }
  func.func @transform_5(%arg0: i32) -> (i32, i32) {
    %c0_i32 = arith.constant 0 : i32
    %c0_i32_0 = arith.constant 0 : i32
    return %arg0, %c0_i32 : i32, i32
  }
}

</mosaic_0001>

<llo_original>
// kernel: tpu_custom_call.1
$region0: #{tpu_custom_call.1}
  #allocation0 [shape = 'u32[]', space=smem, size = 0x4, offset = 0x4, fixed_abs, tag = 'smem constant byte address 0x4 - core index']
  #allocation1 [shape = 'u32[72,128]{1,0:T(1,128)}', space=vmem, size = 0x9000, scoped, tag = 'internal scratch']
  %s0 = inlined_call_operand.hbm [shape: f32[8,128], index: 0, kind: input, shape index: {}]
  %s1 = inlined_call_operand.hbm [shape: f32[128,128], index: 1, kind: input, shape index: {}]
  %s2 = inlined_call_operand.vmem [shape: f32[1,128], index: 2, kind: input, shape index: {}]
  %s3 = inlined_call_operand.hbm [shape: f32[128,128], index: 3, kind: input, shape index: {}]
  %s4 = inlined_call_operand.vmem [shape: f32[1,128], index: 4, kind: input, shape index: {}]
  %s5 = inlined_call_operand.hbm [shape: f32[8,128], index: 5, kind: output, shape index: {}]
  %s6 = sld [smem:[#allocation0]]
  $region42: #{tpu_custom_call.1} parent=0
    _
  %s8 = ssub.s32 1, %s6
  %s9 = scalar_select 0, %s8, %s6
  $region1: #{tpu_custom_call.1} parent=0
    #allocation2 [shape = 'u8[4096]{0}', space=vmem, size = 0x1000, scoped, tag = 'input window, operand 0, single buffered']
    #allocation3 [shape = 's32[1]{0}', space=sflag, size = 0x4, scoped, tag = 'scoped memory for tpu_custom_call.1']
    #allocation4 [shape = 's32[1]{0}', space=sflag, size = 0x4, scoped, tag = 'scoped memory for tpu_custom_call.1']
    #allocation5 [shape = 'u8[65536]{0}', space=vmem, size = 0x10000, scoped, tag = 'input window, operand 1, single buffered']
    #allocation6 [shape = 's32[1]{0}', space=sflag, size = 0x4, scoped, tag = 'scoped memory for tpu_custom_call.1']
    #allocation7 [shape = 'u8[65536]{0}', space=vmem, size = 0x10000, scoped, tag = 'input window, operand 3, single buffered']
    #allocation8 [shape = 'u8[4096]{0}', space=vmem, size = 0x1000, scoped, tag = 'output window, operand 0, single buffered']
    %10 = vsyncpa [#allocation3], 0
    %11 = vsyncpa [#allocation6], 0
    %12 = vsyncpa [#allocation4], 0
    // Predicated region
    $region2: #{tpu_custom_call.1} parent=1 // pred_check
      _
    $region3: #{tpu_custom_call.1} parent=1 // pred_check_branch
      %14 = sbr.rel (0) target = $region5
    $region4: #{tpu_custom_call.1} parent=1 // pred_region
      %16 = vsyncadd [#allocation3], 0
      %s18 = sshll.u32 %s0, 4
      %s19 = int_to_ptr.hbm [resolvable:$true] %s18
      %s20 = sshll.u32 [#allocation2], 4
      %s21 = int_to_ptr.vmem [resolvable:$true] %s20
      %23 = dma.hbm_to_vmem [thread:$0]  %s19, 128, %s21, [#allocation3]
    $region5: #{tpu_custom_call.1} parent=1 // pred_fallthru
      _
    // Predicated region
    $region6: #{tpu_custom_call.1} parent=1 // pred_check
      _
    $region7: #{tpu_custom_call.1} parent=1 // pred_check_branch
      %25 = sbr.rel (0) target = $region9
    $region8: #{tpu_custom_call.1} parent=1 // pred_region
      %27 = vsyncadd [#allocation6], 0
      %s28 = sshll.u32 %s1, 4
      %s29 = int_to_ptr.hbm [resolvable:$true] %s28
      %s30 = sshll.u32 [#allocation5], 4
      %s31 = int_to_ptr.vmem [resolvable:$true] %s30
      %36 = dma.hbm_to_vmem [thread:$0]  %s29, 2048, %s31, [#allocation6], 128, 128, 8
    $region9: #{tpu_custom_call.1} parent=1 // pred_fallthru
      _
    // Predicated region
    $region10: #{tpu_custom_call.1} parent=1 // pred_check
      _
    $region11: #{tpu_custom_call.1} parent=1 // pred_check_branch
      %38 = sbr.rel (0) target = $region13
    $region12: #{tpu_custom_call.1} parent=1 // pred_region
      _
    $region13: #{tpu_custom_call.1} parent=1 // pred_fallthru
      _
    // Predicated region
    $region14: #{tpu_custom_call.1} parent=1 // pred_check
      _
    $region15: #{tpu_custom_call.1} parent=1 // pred_check_branch
      %40 = sbr.rel (0) target = $region17
    $region16: #{tpu_custom_call.1} parent=1 // pred_region
      %42 = vsyncadd [#allocation6], 0
      %s43 = sshll.u32 %s3, 4
      %s44 = int_to_ptr.hbm [resolvable:$true] %s43
      %s45 = sshll.u32 [#allocation7], 4
      %s46 = int_to_ptr.vmem [resolvable:$true] %s45
      %51 = dma.hbm_to_vmem [thread:$0]  %s44, 2048, %s46, [#allocation6], 128, 128, 8
    $region17: #{tpu_custom_call.1} parent=1 // pred_fallthru
      _
    // Predicated region
    $region18: #{tpu_custom_call.1} parent=1 // pred_check
      _
    $region19: #{tpu_custom_call.1} parent=1 // pred_check_branch
      %53 = sbr.rel (0) target = $region21
    $region20: #{tpu_custom_call.1} parent=1 // pred_region
      _
    $region21: #{tpu_custom_call.1} parent=1 // pred_fallthru
      _
    // Predicated region
    $region22: #{tpu_custom_call.1} parent=1 // pred_check
      _
    $region23: #{tpu_custom_call.1} parent=1 // pred_check_branch
      %55 = sbr.rel (0) target = $region25
    $region24: #{tpu_custom_call.1} parent=1 // pred_region
      %57 = dma.done [#allocation3], 128
    $region25: #{tpu_custom_call.1} parent=1 // pred_fallthru
      _
    // Predicated region
    $region26: #{tpu_custom_call.1} parent=1 // pred_check
      _
    $region27: #{tpu_custom_call.1} parent=1 // pred_check_branch
      %59 = sbr.rel (0) target = $region29
    $region28: #{tpu_custom_call.1} parent=1 // pred_region
      %61 = dma.done [#allocation6], 2048
    $region29: #{tpu_custom_call.1} parent=1 // pred_fallthru
      _
    // Predicated region
    $region30: #{tpu_custom_call.1} parent=1 // pred_check
      _
    $region31: #{tpu_custom_call.1} parent=1 // pred_check_branch
      %63 = sbr.rel (0) target = $region33
    $region32: #{tpu_custom_call.1} parent=1 // pred_region
      %65 = dma.done [#allocation6], 2048
    $region33: #{tpu_custom_call.1} parent=1 // pred_fallthru
      _
    %v66 = vld [vmem:[#allocation2] sm:$0xff]
    %v67 = vld [vmem:[#allocation5] sm:$0xff]
    %v68 = vld [vmem:[#allocation5 + $0x8] sm:$0xff]
    %v69 = vld [vmem:[#allocation5 + $0x10] sm:$0xff]
    %v70 = vld [vmem:[#allocation5 + $0x18] sm:$0xff]
    %v71 = vld [vmem:[#allocation5 + $0x20] sm:$0xff]
    %v72 = vld [vmem:[#allocation5 + $0x28] sm:$0xff]
    %v73 = vld [vmem:[#allocation5 + $0x30] sm:$0xff]
    %v74 = vld [vmem:[#allocation5 + $0x38] sm:$0xff]
    %v75 = vld [vmem:[#allocation5 + $0x40] sm:$0xff]
    %v76 = vld [vmem:[#allocation5 + $0x48] sm:$0xff]
    %v77 = vld [vmem:[#allocation5 + $0x50] sm:$0xff]
    %v78 = vld [vmem:[#allocation5 + $0x58] sm:$0xff]
    %v79 = vld [vmem:[#allocation5 + $0x60] sm:$0xff]
    %v80 = vld [vmem:[#allocation5 + $0x68] sm:$0xff]
    %v81 = vld [vmem:[#allocation5 + $0x70] sm:$0xff]
    %v82 = vld [vmem:[#allocation5 + $0x78] sm:$0xff]
    %v83 = vld [vmem:[%s2] sm:$0x1]
    %v85 = vperm.slane %v83, 0
    %87 = vmatpush.msra.mxu0 %v82
    %88 = vmatpush.msra.mxu0 %v81
    %89 = vmatpush.msra.mxu0 %v80
    %90 = vmatpush.msra.mxu0 %v79
    %91 = vmatpush.msra.mxu0 %v78
    %92 = vmatpush.msra.mxu0 %v77
    %93 = vmatpush.msra.mxu0 %v76
    %94 = vmatpush.msra.mxu0 %v75
    %95 = vmatpush.msra.mxu0 %v74
    %96 = vmatpush.msra.mxu0 %v73
    %97 = vmatpush.msra.mxu0 %v72
    %98 = vmatpush.msra.mxu0 %v71
    %99 = vmatpush.msra.mxu0 %v70
    %100 = vmatpush.msra.mxu0 %v69
    %101 = vmatpush.msra.mxu0 %v68
    %102 = vmatpush.msra.mxu0 %v67
    %103 = vmatmul.f32.gmra.mxu0 %v66
    %v104 = vpop.f32.mrf.mxu0
    %v105 = vadd.f32 %v85, %v104
    %106 = vdwg.mxu0
    %v107 = vmax.f32 %v105, 0.0
    %v108 = vld [vmem:[#allocation7] sm:$0xff]
    %v109 = vld [vmem:[#allocation7 + $0x8] sm:$0xff]
    %v110 = vld [vmem:[#allocation7 + $0x10] sm:$0xff]
    %v111 = vld [vmem:[#allocation7 + $0x18] sm:$0xff]
    %v112 = vld [vmem:[#allocation7 + $0x20] sm:$0xff]
    %v113 = vld [vmem:[#allocation7 + $0x28] sm:$0xff]
    %v114 = vld [vmem:[#allocation7 + $0x30] sm:$0xff]
    %v115 = vld [vmem:[#allocation7 + $0x38] sm:$0xff]
    %v116 = vld [vmem:[#allocation7 + $0x40] sm:$0xff]
    %v117 = vld [vmem:[#allocation7 + $0x48] sm:$0xff]
    %v118 = vld [vmem:[#allocation7 + $0x50] sm:$0xff]
    %v119 = vld [vmem:[#allocation7 + $0x58] sm:$0xff]
    %v120 = vld [vmem:[#allocation7 + $0x60] sm:$0xff]
    %v121 = vld [vmem:[#allocation7 + $0x68] sm:$0xff]
    %v122 = vld [vmem:[#allocation7 + $0x70] sm:$0xff]
    %v123 = vld [vmem:[#allocation7 + $0x78] sm:$0xff]
    %v124 = vld [vmem:[%s4] sm:$0x1]
    %v126 = vperm.slane %v124, 0
    %128 = vmatpush.msra.mxu0 %v123
    %129 = vmatpush.msra.mxu0 %v122
    %130 = vmatpush.msra.mxu0 %v121
    %131 = vmatpush.msra.mxu0 %v120
    %132 = vmatpush.msra.mxu0 %v119
    %133 = vmatpush.msra.mxu0 %v118
    %134 = vmatpush.msra.mxu0 %v117
    %135 = vmatpush.msra.mxu0 %v116
    %136 = vmatpush.msra.mxu0 %v115
    %137 = vmatpush.msra.mxu0 %v114
    %138 = vmatpush.msra.mxu0 %v113
    %139 = vmatpush.msra.mxu0 %v112
    %140 = vmatpush.msra.mxu0 %v111
    %141 = vmatpush.msra.mxu0 %v110
    %142 = vmatpush.msra.mxu0 %v109
    %143 = vmatpush.msra.mxu0 %v108
    %144 = vmatmul.f32.gmra.mxu0 %v107
    %v145 = vpop.f32.mrf.mxu0
    %v146 = vadd.f32 %v126, %v145
    %147 = vdwg.mxu0
    %148 = vst [vmem:[#allocation8] sm:$0xff] %v146
    // Predicated region
    $region34: #{tpu_custom_call.1} parent=1 // pred_check
      _
    $region35: #{tpu_custom_call.1} parent=1 // pred_check_branch
      %150 = sbr.rel (0) target = $region37
    $region36: #{tpu_custom_call.1} parent=1 // pred_region
      %152 = vsyncadd [#allocation4], 0
      %s154 = sshll.u32 [#allocation8], 4
      %s155 = int_to_ptr.vmem [resolvable:$true] %s154
      %s156 = sshll.u32 %s5, 4
      %s157 = int_to_ptr.hbm [resolvable:$true] %s156
      %159 = dma.vmem_to_hbm [thread:$0]  %s155, 128, %s157, [#allocation4]
    $region37: #{tpu_custom_call.1} parent=1 // pred_fallthru
      _
    // Predicated region
    $region38: #{tpu_custom_call.1} parent=1 // pred_check
      _
    $region39: #{tpu_custom_call.1} parent=1 // pred_check_branch
      %161 = sbr.rel (0) target = $region41
    $region40: #{tpu_custom_call.1} parent=1 // pred_region
      %163 = dma.done [#allocation4], 128
    $region41: #{tpu_custom_call.1} parent=1 // pred_fallthru
      _
    %164 = vsyncpa [#allocation3], 1
    %165 = vsyncpa [#allocation6], 1
    %166 = vsyncpa [#allocation4], 1

</llo_original>
